<compile_context>
chip_gen: v7x
topology: tpu7x:2x2x1
jax: 0.10.0
libtpu: 0.0.40
codegen_flags: <defaults>
</compile_context>

<pallas_src>
import functools

import jax
import jax.numpy as jnp
from jax.experimental import pallas as pl
from jax.experimental.pallas import tpu as pltpu


_LANE = 128
_MAX_TILE_N = 8192                      # cap; big enough to swamp per-step overhead
_VMEM_TILE_BUDGET = 28 * 1024 * 1024    # keep per-step footprint under ~28 MiB
_MIN_GRID_STEPS = 4                     # >=2 needed for v7x dual-TC, 4 for balance


def _pos_emb_kernel(x_ref, w1_ref, b1_ref, w2_ref, b2_ref, o_ref):
    # x_ref: (1, C_in, TN)  channel-major block, N on the lane axis.
    # w1_ref: (F, C_in) with eval-mode BN scale folded in; b1_ref: (F, 1) folded shift.
    x = x_ref[0]                        # (C_in, TN)
    w1 = w1_ref[...]                    # (F, C_in)
    b1 = b1_ref[...]                    # (F, 1)
    c_in = w1.shape[1]

    # Conv1d #1 (k=1).  Tiny contraction (C_in == 3): unrolled VPU FMAs with the
    # accumulator initialized from the folded bias (saves one full (F, TN) VPU pass).
    # Keeps the MXU free for the second conv.
    if c_in <= 8:
        h = b1 + w1[:, 0:1] * x[0:1, :]                               # (F, TN)
        for c in range(1, c_in):                                      # static unroll
            h = h + w1[:, c:c + 1] * x[c:c + 1, :]
    else:
        h = jax.lax.dot_general(w1, x, (((1,), (0,)), ((), ())),
                                preferred_element_type=jnp.float32) + b1
    h = jnp.maximum(h, 0.0)             # ReLU

    # Conv1d #2 (k=1): (F, F) @ (F, TN) on the MXU, f32 accumulate.  If the wrapper
    # provided bf16 weights, cast the activation to match (native MXU dtype).
    w2 = w2_ref[...]
    y = jnp.dot(w2, h.astype(w2.dtype), preferred_element_type=jnp.float32)
    o_ref[0] = (y + b2_ref[...]).astype(o_ref.dtype)                  # lane-dense store


def _estimate_vmem_bytes(F, C_in, tile_n):
    """Rough per-step VMEM footprint (double-buffered blocks + f32 intermediates)."""
    x_blk = 8 * tile_n * 4                                  # C_in padded to 8 sublanes
    out_blk = F * tile_n * 4
    weights = (F * max(C_in, _LANE) + F * F + 2 * F * _LANE) * 4   # padded weight/bias blocks
    interm = 2 * F * tile_n * 4                             # h and y f32 temporaries
    return 2 * (x_blk + out_blk + weights) + interm


def _round_down_to_lane(n):
    return max(_LANE, (n // _LANE) * _LANE)


def _choose_tile_n(N, B, F, C_in):
    """Largest legal tile that fits the VMEM budget, then split for >= 4 grid steps."""
    if N <= _LANE:
        return N                                            # cannot split below 128
    if N <= _MAX_TILE_N and _estimate_vmem_bytes(F, C_in, N) <= _VMEM_TILE_BUDGET:
        tile = N                                            # full-N block (always legal)
    else:
        tile = _round_down_to_lane(min(N, _MAX_TILE_N))
        while tile > _LANE and _estimate_vmem_bytes(F, C_in, tile) > _VMEM_TILE_BUDGET:
            tile = _round_down_to_lane(tile // 2)
    # Guarantee enough grid steps: "parallel" axes are sharded across v7x's two
    # TensorCores only if there is more than one step.
    while B * pl.cdiv(N, tile) < _MIN_GRID_STEPS and tile > _LANE:
        new = _round_down_to_lane(tile // 2)
        if new == tile:
            break
        tile = new
    return tile


def position_embedding_learned(xyz, w1, b1, gamma, beta, running_mean, running_var,
                               w2, b2, *, eps=1e-5, tile_n=None,
                               channel_major_input=False,
                               bf16_matmul=False, out_dtype=jnp.float32):
    """Forward of PositionEmbeddingLearned (eval-mode BN).

    xyz: (B, N, C_in) float32  (or (B, C_in, N) if channel_major_input=True, which
         skips the wrapper transpose / its extra HBM pass).
    Returns (B, F, N) in out_dtype (float32 by default, matching the PyTorch module).
    bf16_matmul=True runs the second conv with bf16 operands (f32 accumulate); keep it
    off if bit-level agreement with the f32 reference matters.
    """
    if channel_major_input:
        xyz_t = xyz.astype(jnp.float32)                                # (B, C_in, N)
        B, C_in, N = xyz_t.shape
    else:
        B, N, C_in = xyz.shape
        # Same up-front transpose the PyTorch module performs; puts N on the lane axis.
        # TODO(synk): if the producer can emit (B, C_in, N) directly, pass
        # channel_major_input=True and drop this extra XLA transpose pass.
        xyz_t = jnp.transpose(xyz.astype(jnp.float32), (0, 2, 1))      # (B, C_in, N)
    F = w1.shape[0]                        # w1: (F, C_in), Conv1d k=1 weight squeezed

    # Fold eval-mode BatchNorm1d into conv1 (trace-time, free on-device):
    #   y = (w1 @ x + b1) * scale + shift  ==  (w1*scale) @ x + (b1*scale + shift)
    scale = gamma / jnp.sqrt(running_var + eps)                        # (F,)
    w1_eff = (w1 * scale[:, None]).astype(jnp.float32)                 # (F, C_in)
    b1_eff = (b1 * scale + beta - running_mean * scale)                # (F,)

    b1_r = b1_eff.reshape(F, 1).astype(jnp.float32)
    b2_r = b2.reshape(F, 1).astype(jnp.float32)
    w2_f = w2.astype(jnp.bfloat16 if bf16_matmul else jnp.float32)

    # N tiling: big tiles amortize the ~0.35 us/step pipeline overhead; the grid is
    # (B, N-tiles), both axes "parallel".  Ragged tail columns are computed on padding
    # and not written back (N is not a reduction axis, so this is safe).
    if tile_n is None:
        tile_n = _choose_tile_n(N, B, F, C_in)
    assert tile_n == N or tile_n % _LANE == 0, "tile_n must be N or a multiple of 128"
    grid = (B, pl.cdiv(N, tile_n))

    # Raise scoped VMEM when the per-step footprint approaches v5e's 16 MiB default.
    vmem_est = _estimate_vmem_bytes(F, C_in, tile_n)
    compiler_kwargs = dict(dimension_semantics=("parallel", "parallel"))
    if vmem_est > 12 * 1024 * 1024:
        compiler_kwargs["vmem_limit_bytes"] = min(48 * 1024 * 1024,
                                                  vmem_est + 8 * 1024 * 1024)

    itemsize_out = jnp.dtype(out_dtype).itemsize
    cost = pl.CostEstimate(
        flops=2 * B * N * (F * C_in + F * F),
        transcendentals=0,
        bytes_accessed=(B * N * (C_in * 4 + F * itemsize_out)
                        + (F * C_in + F * F + 2 * F) * 4),
    )

    out = pl.pallas_call(
        _pos_emb_kernel,
        out_shape=jax.ShapeDtypeStruct((B, F, N), out_dtype),
        grid=grid,
        in_specs=[
            pl.BlockSpec((1, C_in, tile_n), lambda b, n: (b, 0, n)),  # xyz (chan-major)
            # Constant index_maps: weight blocks are not re-DMA'd across grid steps.
            pl.BlockSpec((F, C_in),         lambda b, n: (0, 0)),     # W1 (BN folded)
            pl.BlockSpec((F, 1),            lambda b, n: (0, 0)),     # b1 (BN folded)
            pl.BlockSpec((F, F),            lambda b, n: (0, 0)),     # W2
            pl.BlockSpec((F, 1),            lambda b, n: (0, 0)),     # b2
        ],
        out_specs=pl.BlockSpec((1, F, tile_n), lambda b, n: (b, 0, n)),
        compiler_params=pltpu.CompilerParams(**compiler_kwargs),
        cost_estimate=cost,
    )(xyz_t, w1_eff, b1_r, w2_f, b2_r)
    return out


def _reference(xyz, w1, b1, gamma, beta, running_mean, running_var, w2, b2, eps=1e-5):
    # Pure-JAX reference of the PyTorch forward (eval-mode BN).
    x = jnp.transpose(xyz, (0, 2, 1))                                  # (B, C_in, N)
    h = jnp.einsum("fc,bcn->bfn", w1, x) + b1[None, :, None]           # Conv1d k=1
    h = (h - running_mean[None, :, None]) / jnp.sqrt(running_var[None, :, None] + eps)
    h = h * gamma[None, :, None] + beta[None, :, None]
    h = jnp.maximum(h, 0.0)
    y = jnp.einsum("gf,bfn->bgn", w2, h) + b2[None, :, None]
    return y


if __name__ == "__main__":
    # Small shapes consistent with the module: 3-channel point coords, F learned feats.
    # B=2, N=256: the automatic tile selection picks tile_n=128 here (to guarantee >= 4
    # grid steps), exercising the tiled-N (B, N-tiles) grid path.
    B, N, C_in, F = 2, 256, 3, 64

    key = jax.random.PRNGKey(0)
    k = jax.random.split(key, 8)

    xyz = jax.random.normal(k[0], (B, N, C_in), dtype=jnp.float32)

    # Deterministic synthetic parameters (shapes from __init__; Conv1d k=1 weights squeezed).
    w1 = 0.1 * jax.random.normal(k[1], (F, C_in), dtype=jnp.float32)    # Conv1d(C_in -> F)
    b1 = 0.1 * jax.random.normal(k[2], (F,), dtype=jnp.float32)
    gamma = 1.0 + 0.1 * jax.random.normal(k[3], (F,), dtype=jnp.float32)
    beta = 0.1 * jax.random.normal(k[4], (F,), dtype=jnp.float32)
    running_mean = 0.05 * jax.random.normal(k[5], (F,), dtype=jnp.float32)
    running_var = jnp.abs(1.0 + 0.1 * jax.random.normal(k[6], (F,), dtype=jnp.float32))
    w2 = 0.1 * jax.random.normal(k[7], (F, F), dtype=jnp.float32)       # Conv1d(F -> F)
    b2 = 0.05 * jnp.ones((F,), dtype=jnp.float32)

    # Default (f32, auto tile selection) path — bit-tolerance 1e-4 vs the reference.
    out = position_embedding_learned(xyz, w1, b1, gamma, beta, running_mean,
                                     running_var, w2, b2)
    out = jax.block_until_ready(out)

    ref = _reference(xyz, w1, b1, gamma, beta, running_mean, running_var, w2, b2)
    assert out.shape == (B, F, N), out.shape
    assert jnp.allclose(out, ref, atol=1e-4, rtol=1e-4), float(jnp.max(jnp.abs(out - ref)))

    # Opt-in bf16 second matmul + bf16 output path (looser tolerance, halves output HBM).
    out_bf16 = position_embedding_learned(xyz, w1, b1, gamma, beta, running_mean,
                                          running_var, w2, b2,
                                          bf16_matmul=True, out_dtype=jnp.bfloat16)
    out_bf16 = jax.block_until_ready(out_bf16)
    assert out_bf16.shape == (B, F, N)
    assert jnp.allclose(out_bf16.astype(jnp.float32), ref, atol=5e-2, rtol=5e-2)

    print("KERNEL_OK")
</pallas_src>

<mosaic_0001>
module attributes {stable_mosaic.version = 11 : i64} {
  func.func @_pos_emb_kernel(%arg0: i32, %arg1: i32, %arg2: memref<1x3x128xf32, #tpu.memory_space<vmem>>, %arg3: memref<64x3xf32, #tpu.memory_space<vmem>>, %arg4: memref<64x1xf32, #tpu.memory_space<vmem>>, %arg5: memref<64x64xf32, #tpu.memory_space<vmem>>, %arg6: memref<64x1xf32, #tpu.memory_space<vmem>>, %arg7: memref<1x64x128xf32, #tpu.memory_space<vmem>>) attributes {dimension_semantics = [#tpu.dimension_semantics<parallel>, #tpu.dimension_semantics<parallel>], iteration_bounds = array<i64: 2, 2>, scalar_prefetch = 0 : i64, scratch_operands = 0 : i64, tpu.core_type = #tpu.core_type<tc>, window_params = [{transform_indices = @transform_0, window_bounds = array<i64: 1, 3, 128>}, {pipeline_mode = #tpu.pipeline_mode<synchronous>, transform_indices = @transform_1, window_bounds = array<i64: 64, 3>}, {pipeline_mode = #tpu.pipeline_mode<synchronous>, transform_indices = @transform_2, window_bounds = array<i64: 64, 1>}, {pipeline_mode = #tpu.pipeline_mode<synchronous>, transform_indices = @transform_3, window_bounds = array<i64: 64, 64>}, {pipeline_mode = #tpu.pipeline_mode<synchronous>, transform_indices = @transform_4, window_bounds = array<i64: 64, 1>}, {transform_indices = @transform_5, window_bounds = array<i64: 1, 64, 128>}]} {
    %c0 = arith.constant 0 : index
    %c0_0 = arith.constant 0 : index
    %c0_1 = arith.constant 0 : index
    %0 = vector.load %arg2[%c0, %c0_0, %c0_1] : memref<1x3x128xf32, #tpu.memory_space<vmem>>, vector<1x3x128xf32>
    %1 = vector.shape_cast %0 : vector<1x3x128xf32> to vector<3x128xf32>
    %c0_2 = arith.constant 0 : index
    %c0_3 = arith.constant 0 : index
    %2 = vector.load %arg3[%c0_2, %c0_3] : memref<64x3xf32, #tpu.memory_space<vmem>>, vector<64x3xf32>
    %c0_4 = arith.constant 0 : index
    %c0_5 = arith.constant 0 : index
    %3 = vector.load %arg4[%c0_4, %c0_5] : memref<64x1xf32, #tpu.memory_space<vmem>>, vector<64x1xf32>
    %4 = vector.extract_strided_slice %2 {offsets = [0, 0], sizes = [64, 1], strides = [1, 1]} : vector<64x3xf32> to vector<64x1xf32>
    %5 = vector.extract_strided_slice %1 {offsets = [0, 0], sizes = [1, 128], strides = [1, 1]} : vector<3x128xf32> to vector<1x128xf32>
    %6 = vector.broadcast %4 : vector<64x1xf32> to vector<64x128xf32>
    %7 = vector.broadcast %5 : vector<1x128xf32> to vector<64x128xf32>
    %8 = arith.mulf %6, %7 : vector<64x128xf32>
    %9 = vector.broadcast %3 : vector<64x1xf32> to vector<64x128xf32>
    %10 = arith.addf %9, %8 : vector<64x128xf32>
    %11 = vector.extract_strided_slice %2 {offsets = [0, 1], sizes = [64, 1], strides = [1, 1]} : vector<64x3xf32> to vector<64x1xf32>
    %12 = vector.extract_strided_slice %1 {offsets = [1, 0], sizes = [1, 128], strides = [1, 1]} : vector<3x128xf32> to vector<1x128xf32>
    %13 = vector.broadcast %11 : vector<64x1xf32> to vector<64x128xf32>
    %14 = vector.broadcast %12 : vector<1x128xf32> to vector<64x128xf32>
    %15 = arith.mulf %13, %14 : vector<64x128xf32>
    %16 = arith.addf %10, %15 : vector<64x128xf32>
    %17 = vector.extract_strided_slice %2 {offsets = [0, 2], sizes = [64, 1], strides = [1, 1]} : vector<64x3xf32> to vector<64x1xf32>
    %18 = vector.extract_strided_slice %1 {offsets = [2, 0], sizes = [1, 128], strides = [1, 1]} : vector<3x128xf32> to vector<1x128xf32>
    %19 = vector.broadcast %17 : vector<64x1xf32> to vector<64x128xf32>
    %20 = vector.broadcast %18 : vector<1x128xf32> to vector<64x128xf32>
    %21 = arith.mulf %19, %20 : vector<64x128xf32>
    %22 = arith.addf %16, %21 : vector<64x128xf32>
    %cst = arith.constant 0.000000e+00 : f32
    %23 = vector.broadcast %cst : f32 to vector<64x128xf32>
    %24 = arith.maximumf %22, %23 : vector<64x128xf32>
    %c0_6 = arith.constant 0 : index
    %c0_7 = arith.constant 0 : index
    %25 = vector.load %arg5[%c0_6, %c0_7] : memref<64x64xf32, #tpu.memory_space<vmem>>, vector<64x64xf32>
    %cst_8 = arith.constant dense<0.000000e+00> : vector<64x128xf32>
    %26 = tpu.matmul %25, %24, %cst_8 {dimension_numbers = #tpu.dot_dimension_numbers<[1], [0], [0], [1], [0, 0, 1, 1], [], []>} : vector<64x64xf32>, vector<64x128xf32>, vector<64x128xf32> -> vector<64x128xf32>
    %c0_9 = arith.constant 0 : index
    %c0_10 = arith.constant 0 : index
    %27 = vector.load %arg6[%c0_9, %c0_10] : memref<64x1xf32, #tpu.memory_space<vmem>>, vector<64x1xf32>
    %28 = vector.broadcast %27 : vector<64x1xf32> to vector<64x128xf32>
    %29 = arith.addf %26, %28 : vector<64x128xf32>
    %c0_11 = arith.constant 0 : index
    %c0_12 = arith.constant 0 : index
    %c0_13 = arith.constant 0 : index
    %30 = vector.load %arg7[%c0_11, %c0_12, %c0_13] : memref<1x64x128xf32, #tpu.memory_space<vmem>>, vector<1x64x128xf32>
    %31 = vector.shape_cast %30 : vector<1x64x128xf32> to vector<64x128xf32>
    %32 = vector.shape_cast %29 : vector<64x128xf32> to vector<1x64x128xf32>
    tpu.vector_store %arg7[%c0_11, %c0_12, %c0_13], %32 {strides = array<i32>} : memref<1x64x128xf32, #tpu.memory_space<vmem>>, vector<1x64x128xf32>,
    return
  }
  func.func @transform_0(%arg0: i32, %arg1: i32) -> (i32, i32, i32) {
    %c0_i32 = arith.constant 0 : i32
    %c0_i32_0 = arith.constant 0 : i32
    return %arg0, %c0_i32, %arg1 : i32, i32, i32
  }
  func.func @transform_1(%arg0: i32, %arg1: i32) -> (i32, i32) {
    %c0_i32 = arith.constant 0 : i32
    %c0_i32_0 = arith.constant 0 : i32
    %c0_i32_1 = arith.constant 0 : i32
    return %c0_i32, %c0_i32_0 : i32, i32
  }
  func.func @transform_2(%arg0: i32, %arg1: i32) -> (i32, i32) {
    %c0_i32 = arith.constant 0 : i32
    %c0_i32_0 = arith.constant 0 : i32
    %c0_i32_1 = arith.constant 0 : i32
    return %c0_i32, %c0_i32_0 : i32, i32
  }
  func.func @transform_3(%arg0: i32, %arg1: i32) -> (i32, i32) {
    %c0_i32 = arith.constant 0 : i32
    %c0_i32_0 = arith.constant 0 : i32
    %c0_i32_1 = arith.constant 0 : i32
    return %c0_i32, %c0_i32_0 : i32, i32
  }
  func.func @transform_4(%arg0: i32, %arg1: i32) -> (i32, i32) {
    %c0_i32 = arith.constant 0 : i32
    %c0_i32_0 = arith.constant 0 : i32
    %c0_i32_1 = arith.constant 0 : i32
    return %c0_i32, %c0_i32_0 : i32, i32
  }
  func.func @transform_5(%arg0: i32, %arg1: i32) -> (i32, i32, i32) {
    %c0_i32 = arith.constant 0 : i32
    %c0_i32_0 = arith.constant 0 : i32
    return %arg0, %c0_i32, %arg1 : i32, i32, i32
  }
}

</mosaic_0001>

<llo_original>
// kernel: tpu_custom_call.1
$region0: #{tpu_custom_call.1}
  #allocation0 [shape = 'u32[]', space=smem, size = 0x4, offset = 0x4, fixed_abs, tag = 'smem constant byte address 0x4 - core index']
  #allocation1 [shape = 'u32[144,128]{1,0:T(1,128)}', space=vmem, size = 0x12000, scoped, tag = 'internal scratch']
  %s0 = inlined_call_operand.vmem [shape: f32[2,3,256], index: 0, kind: input, shape index: {}]
  %s1 = inlined_call_operand.vmem [shape: f32[64,3], index: 1, kind: input, shape index: {}]
  %s2 = inlined_call_operand.vmem [shape: f32[64,1], index: 2, kind: input, shape index: {}]
  %s3 = inlined_call_operand.vmem [shape: f32[64,64], index: 3, kind: input, shape index: {}]
  %s4 = inlined_call_operand.vmem [shape: f32[64,1], index: 4, kind: input, shape index: {}]
  %s5 = inlined_call_operand.hbm [shape: f32[2,64,256], index: 5, kind: output, shape index: {}]
  %s6 = sld [smem:[#allocation0]]
  $region53: #{tpu_custom_call.1} parent=0
    _
  %s8 = ssub.s32 1, %s6
  %s9 = scalar_select 0, %s8, %s6
  $region1: #{tpu_custom_call.1} parent=0
    #allocation2 [shape = 'u8[65536]{0}', space=vmem, size = 0x10000, scoped, tag = 'output window, operand 0']
    #allocation3 [shape = 's32[2]{0}', space=sflag, size = 0x8, scoped, tag = 'scoped memory for tpu_custom_call.1']
    %10 = vsyncpa [#allocation3], 0
    %s11 = scalar_lea.sflag [#allocation3], 1
    %12 = vsyncpa %s11, 0
    loop: start=0, step=1, limit=6
    $region2: #{tpu_custom_call.1} parent=1 // loop_pre_header
      _
    $region3: #{tpu_custom_call.1} parent=1 // loop_header
      %s14 = sphi 0, %s18
      %p15 = scmp.ge.s32.totalorder %s14, 6
      %s21 = sphi 0, %s33
      %s22 = sphi 0, %s29
      %s23 = sphi 0, %s21
      %s24 = sphi 0, %s22
      %s25 = sphi 0, %s23
      %s26 = sphi 0, %s24
      %s38 = sphi 0, %s40
      %s41 = sphi 0, %s38
      %s42 = sphi 0, %s41
      %s58 = sphi 0, %s42
      %s62 = sphi 0, %s62
      %s64 = sphi 0, %s62
      %s65 = sphi 0, %s64
      %s79 = sphi 0, %s65
      %s83 = sphi 0, %s83
      %s85 = sphi 0, %s83
      %s86 = sphi 0, %s85
      %s100 = sphi 0, %s86
      %s104 = sphi 0, %s104
      %s106 = sphi 0, %s104
      %s107 = sphi 0, %s106
      %s121 = sphi 0, %s107
      %s125 = sphi 0, %s125
      %s127 = sphi 0, %s125
      %s128 = sphi 0, %s127
      %s142 = sphi 0, %s128
      %s150 = sphi 0, %s152
      %s153 = sphi 0, %s150
      %s154 = sphi 0, %s153
      %s170 = sphi 0, %s154
    $region4: #{tpu_custom_call.1} parent=1 // loop_header_branch
      %17 = sbr.rel (%p15) target = $region8
    $region5: #{tpu_custom_call.1} parent=1 // loop_body
      %s19 = ssub.s32 %s14, 1
      %s20 = ssub.s32 %s14, 2
      %s27 = sadd.s32 1, %s22
      %p28 = scmp.ge.s32.totalorder %s27, 2
      %s29 = scalar_select %p28, 0, %s27
      %s30 = sadd.s32 1, %s21
      %s31 = scalar_select %p28, %s30, %s21
      %p32 = scmp.ge.s32.totalorder %s31, 2
      %s33 = scalar_select %p32, 0, %s31
      %s34 = ssub.s32 %s21, %s33
      %s35 = ssub.s32 %s22, %s29
      %s36 = sor.u32 %s34, %s35
      %p37 = scmp.eq.s32.totalorder %s36, 0
      %s39 = sadd.s32 %s38, 1
      %s40 = scalar_select %p37, %s38, %s39
      %p43 = pneg %p37
      %p44 = scmp.eq.s32.totalorder %s14, 3
      %p45 = por %p43, %p44
      %p46 = scmp.ne.s32.totalorder %s38, %s41
      %p47 = scmp.eq.s32.totalorder %s14, 0
      %p48 = por %p46, %p47
      %p49 = scmp.ne.s32.totalorder %s38, %s41
      %p50 = scmp.eq.s32.totalorder %s19, 3
      %p51 = por %p49, %p50
      %p52 = scmp.ne.s32.totalorder %s41, %s42
      %p53 = scmp.eq.s32.totalorder %s19, 0
      %p54 = por %p52, %p53
      %p55 = scmp.ne.s32.totalorder %s41, %s42
      %p56 = scmp.eq.s32.totalorder %s20, 3
      %p57 = por %p55, %p56
      %p59 = scmp.ne.s32.totalorder %s42, %s58
      %p60 = scmp.eq.s32.totalorder %s20, 0
      %p61 = por %p59, %p60
      %s63 = sadd.s32 %s62, 1
      %p66 = scmp.eq.s32.totalorder %s14, 3
      %p67 = scmp.ne.s32.totalorder %s62, %s64
      %p68 = scmp.eq.s32.totalorder %s14, 0
      %p69 = por %p67, %p68
      %p70 = scmp.ne.s32.totalorder %s62, %s64
      %p71 = scmp.eq.s32.totalorder %s19, 3
      %p72 = por %p70, %p71
      %p73 = scmp.ne.s32.totalorder %s64, %s65
      %p74 = scmp.eq.s32.totalorder %s19, 0
      %p75 = por %p73, %p74
      %p76 = scmp.ne.s32.totalorder %s64, %s65
      %p77 = scmp.eq.s32.totalorder %s20, 3
      %p78 = por %p76, %p77
      %p80 = scmp.ne.s32.totalorder %s65, %s79
      %p81 = scmp.eq.s32.totalorder %s20, 0
      %p82 = por %p80, %p81
      %s84 = sadd.s32 %s83, 1
      %p87 = scmp.eq.s32.totalorder %s14, 3
      %p88 = scmp.ne.s32.totalorder %s83, %s85
      %p89 = scmp.eq.s32.totalorder %s14, 0
      %p90 = por %p88, %p89
      %p91 = scmp.ne.s32.totalorder %s83, %s85
      %p92 = scmp.eq.s32.totalorder %s19, 3
      %p93 = por %p91, %p92
      %p94 = scmp.ne.s32.totalorder %s85, %s86
      %p95 = scmp.eq.s32.totalorder %s19, 0
      %p96 = por %p94, %p95
      %p97 = scmp.ne.s32.totalorder %s85, %s86
      %p98 = scmp.eq.s32.totalorder %s20, 3
      %p99 = por %p97, %p98
      %p101 = scmp.ne.s32.totalorder %s86, %s100
      %p102 = scmp.eq.s32.totalorder %s20, 0
      %p103 = por %p101, %p102
      %s105 = sadd.s32 %s104, 1
      %p108 = scmp.eq.s32.totalorder %s14, 3
      %p109 = scmp.ne.s32.totalorder %s104, %s106
      %p110 = scmp.eq.s32.totalorder %s14, 0
      %p111 = por %p109, %p110
      %p112 = scmp.ne.s32.totalorder %s104, %s106
      %p113 = scmp.eq.s32.totalorder %s19, 3
      %p114 = por %p112, %p113
      %p115 = scmp.ne.s32.totalorder %s106, %s107
      %p116 = scmp.eq.s32.totalorder %s19, 0
      %p117 = por %p115, %p116
      %p118 = scmp.ne.s32.totalorder %s106, %s107
      %p119 = scmp.eq.s32.totalorder %s20, 3
      %p120 = por %p118, %p119
      %p122 = scmp.ne.s32.totalorder %s107, %s121
      %p123 = scmp.eq.s32.totalorder %s20, 0
      %p124 = por %p122, %p123
      %s126 = sadd.s32 %s125, 1
      %p129 = scmp.eq.s32.totalorder %s14, 3
      %p130 = scmp.ne.s32.totalorder %s125, %s127
      %p131 = scmp.eq.s32.totalorder %s14, 0
      %p132 = por %p130, %p131
      %p133 = scmp.ne.s32.totalorder %s125, %s127
      %p134 = scmp.eq.s32.totalorder %s19, 3
      %p135 = por %p133, %p134
      %p136 = scmp.ne.s32.totalorder %s127, %s128
      %p137 = scmp.eq.s32.totalorder %s19, 0
      %p138 = por %p136, %p137
      %p139 = scmp.ne.s32.totalorder %s127, %s128
      %p140 = scmp.eq.s32.totalorder %s20, 3
      %p141 = por %p139, %p140
      %p143 = scmp.ne.s32.totalorder %s128, %s142
      %p144 = scmp.eq.s32.totalorder %s20, 0
      %p145 = por %p143, %p144
      %s146 = ssub.s32 %s21, %s33
      %s147 = ssub.s32 %s22, %s29
      %s148 = sor.u32 %s146, %s147
      %p149 = scmp.eq.s32.totalorder %s148, 0
      %s151 = sadd.s32 %s150, 1
      %s152 = scalar_select %p149, %s150, %s151
      %p155 = pneg %p149
      %p156 = scmp.eq.s32.totalorder %s14, 3
      %p157 = por %p155, %p156
      %p158 = scmp.ne.s32.totalorder %s150, %s153
      %p159 = scmp.eq.s32.totalorder %s14, 0
      %p160 = por %p158, %p159
      %p161 = scmp.ne.s32.totalorder %s150, %s153
      %p162 = scmp.eq.s32.totalorder %s19, 3
      %p163 = por %p161, %p162
      %p164 = scmp.ne.s32.totalorder %s153, %s154
      %p165 = scmp.eq.s32.totalorder %s19, 0
      %p166 = por %p164, %p165
      %p167 = scmp.ne.s32.totalorder %s153, %s154
      %p168 = scmp.eq.s32.totalorder %s20, 3
      %p169 = por %p167, %p168
      %p171 = scmp.ne.s32.totalorder %s154, %s170
      %p172 = scmp.eq.s32.totalorder %s20, 0
      %p173 = por %p171, %p172
      %p174 = scmp.le.s32.totalorder 1, %s14
      %p175 = scmp.lt.s32.totalorder %s14, 5
      %p176 = pnand %p174, %p175
      %p177 = pneg %p176
      // Predicated region
      $region9: #{tpu_custom_call.1} parent=5 // pred_check
        _
      $region10: #{tpu_custom_call.1} parent=5 // pred_check_branch
        %179 = sbr.rel (%p176) target = $region12
      $region11: #{tpu_custom_call.1} parent=5 // pred_region
        %s180 = ssub.s32 %s14, 1
        // Predicated region
        $region13: #{tpu_custom_call.1} parent=11 // pred_check
          %p181 = pneg %p75
        $region14: #{tpu_custom_call.1} parent=11 // pred_check_branch
          %183 = sbr.rel (%p181) target = $region16
        $region15: #{tpu_custom_call.1} parent=11 // pred_region
          _
        $region16: #{tpu_custom_call.1} parent=11 // pred_fallthru
          _
        // Predicated region
        $region17: #{tpu_custom_call.1} parent=11 // pred_check
          %p184 = pneg %p96
        $region18: #{tpu_custom_call.1} parent=11 // pred_check_branch
          %186 = sbr.rel (%p184) target = $region20
        $region19: #{tpu_custom_call.1} parent=11 // pred_region
          _
        $region20: #{tpu_custom_call.1} parent=11 // pred_fallthru
          _
        // Predicated region
        $region21: #{tpu_custom_call.1} parent=11 // pred_check
          %p187 = pneg %p117
        $region22: #{tpu_custom_call.1} parent=11 // pred_check_branch
          %189 = sbr.rel (%p187) target = $region24
        $region23: #{tpu_custom_call.1} parent=11 // pred_region
          _
        $region24: #{tpu_custom_call.1} parent=11 // pred_fallthru
          _
        // Predicated region
        $region25: #{tpu_custom_call.1} parent=11 // pred_check
          %p190 = pneg %p138
        $region26: #{tpu_custom_call.1} parent=11 // pred_check_branch
          %192 = sbr.rel (%p190) target = $region28
        $region27: #{tpu_custom_call.1} parent=11 // pred_region
          _
        $region28: #{tpu_custom_call.1} parent=11 // pred_fallthru
          _
      $region12: #{tpu_custom_call.1} parent=5 // pred_fallthru
        _
      %p193 = scmp.lt.s32.totalorder %s14, 4
      // Predicated region
      $region29: #{tpu_custom_call.1} parent=5 // pred_check
        %p194 = pneg %p193
      $region30: #{tpu_custom_call.1} parent=5 // pred_check_branch
        %196 = sbr.rel (%p194) target = $region32
      $region31: #{tpu_custom_call.1} parent=5 // pred_region
        // Predicated region
        $region33: #{tpu_custom_call.1} parent=31 // pred_check
          %p197 = pneg %p48
        $region34: #{tpu_custom_call.1} parent=31 // pred_check_branch
          %199 = sbr.rel (%p197) target = $region36
        $region35: #{tpu_custom_call.1} parent=31 // pred_region
          %p200 = scmp.lt.s32.totalorder %s21, 1
          %s201 = scalar_select %p200, %s21, 1
          %p202 = scmp.lt.s32.totalorder %s22, 1
          %s203 = scalar_select %p202, %s22, 1
          %s204 = smul.addr %s201, 2
          %s205 = sadd.s32 %s203, %s204
          %s206 = smul.addr %s205, 4
          %s207 = scalar_lea.vmem %s0, %s206
        $region36: #{tpu_custom_call.1} parent=31 // pred_fallthru
          _
      $region32: #{tpu_custom_call.1} parent=5 // pred_fallthru
        _
      %p208 = scmp.le.s32.totalorder 1, %s14
      %p209 = scmp.lt.s32.totalorder %s14, 5
      %p210 = pnand %p208, %p209
      %p211 = pneg %p210
      // Predicated region
      $region37: #{tpu_custom_call.1} parent=5 // pred_check
        _
      $region38: #{tpu_custom_call.1} parent=5 // pred_check_branch
        %213 = sbr.rel (%p210) target = $region40
      $region39: #{tpu_custom_call.1} parent=5 // pred_region
        %s214 = ssub.s32 %s14, 1
        %p215 = scmp.lt.s32.totalorder %s23, 1
        %s216 = scalar_select %p215, %s23, 1
        %p217 = scmp.lt.s32.totalorder %s24, 1
        %s218 = scalar_select %p217, %s24, 1
        %s219 = smul.addr %s216, 2
        %s220 = sadd.s32 %s218, %s219
        %s221 = smul.addr %s220, 4
        %s222 = scalar_lea.vmem %s0, %s221
        %p223 = pneg %p54
        %p224 = pneg %p51
        %p225 = pneg %p75
        %p226 = pneg %p72
        %p227 = pneg %p96
        %p228 = pneg %p93
        %p229 = pneg %p117
        %p230 = pneg %p114
        %p231 = pneg %p138
        %p232 = pneg %p135
        %p233 = pneg %p166
        %p234 = pneg %p163
        %s235 = sand.u32 %s153, 1
        %s236 = scalar_lea.sflag [#allocation3], %s235
        %s237 = sand.u32 %s153, 1
        %s238 = smul.addr %s237, 64
        %s239 = scalar_lea.vmem [#allocation2], %s238
        %p240 = scmp.lt.s32.totalorder %s23, 1
        %s241 = scalar_select %p240, %s23, 1
        %p242 = scmp.lt.s32.totalorder %s24, 1
        %s243 = scalar_select %p242, %s24, 1
        %s244 = smul.addr %s241, 2
        %s245 = sadd.s32 %s243, %s244
        %s246 = smul.addr %s245, 4
        %s247 = scalar_lea.vmem %s0, %s246
        %v248 = vld [vmem:[%s247] sm:$0x7]
        %v249 = vld [vmem:[%s1] sm:$0xff]
        %v250 = vld [vmem:[%s1 + $0x8] sm:$0xff]
        %v251 = vld [vmem:[%s1 + $0x10] sm:$0xff]
        %v252 = vld [vmem:[%s1 + $0x18] sm:$0xff]
        %v253 = vld [vmem:[%s1 + $0x20] sm:$0xff]
        %v254 = vld [vmem:[%s1 + $0x28] sm:$0xff]
        %v255 = vld [vmem:[%s1 + $0x30] sm:$0xff]
        %v256 = vld [vmem:[%s1 + $0x38] sm:$0xff]
        %v257 = vld [vmem:[%s2] sm:$0xff]
        %v258 = vld [vmem:[%s2 + $0x8] sm:$0xff]
        %v259 = vld [vmem:[%s2 + $0x10] sm:$0xff]
        %v260 = vld [vmem:[%s2 + $0x18] sm:$0xff]
        %v261 = vld [vmem:[%s2 + $0x20] sm:$0xff]
        %v262 = vld [vmem:[%s2 + $0x28] sm:$0xff]
        %v263 = vld [vmem:[%s2 + $0x30] sm:$0xff]
        %v264 = vld [vmem:[%s2 + $0x38] sm:$0xff]
        %266 = vset.pattern.permute.xlu0 0
        %267 = vperm.xlu0 %266, %v249
        %v268 = vpop.permute.xlu0 %267
        %271 = vset.pattern.permute.xlu0 0
        %272 = vperm.xlu0 %271, %v250
        %v273 = vpop.permute.xlu0 %272
        %276 = vset.pattern.permute.xlu0 0
        %277 = vperm.xlu0 %276, %v251
        %v278 = vpop.permute.xlu0 %277
        %281 = vset.pattern.permute.xlu0 0
        %282 = vperm.xlu0 %281, %v252
        %v283 = vpop.permute.xlu0 %282
        %286 = vset.pattern.permute.xlu0 0
        %287 = vperm.xlu0 %286, %v253
        %v288 = vpop.permute.xlu0 %287
        %291 = vset.pattern.permute.xlu0 0
        %292 = vperm.xlu0 %291, %v254
        %v293 = vpop.permute.xlu0 %292
        %296 = vset.pattern.permute.xlu0 0
        %297 = vperm.xlu0 %296, %v255
        %v298 = vpop.permute.xlu0 %297
        %301 = vset.pattern.permute.xlu0 0
        %302 = vperm.xlu0 %301, %v256
        %v303 = vpop.permute.xlu0 %302
        %v305 = vlaneseq
        %v306 = vshrl.u32 %v305, 7
        %v307 = vsub.s32 0, %v306
        %v308 = vrot.slane %v248, %v307
        %v309 = vmul.f32 %v268, %v308
        %v310 = vmul.f32 %v273, %v308
        %v311 = vmul.f32 %v278, %v308
        %v312 = vmul.f32 %v283, %v308
        %v313 = vmul.f32 %v288, %v308
        %v314 = vmul.f32 %v293, %v308
        %v315 = vmul.f32 %v298, %v308
        %v316 = vmul.f32 %v303, %v308
        %318 = vset.pattern.permute.xlu0 0
        %319 = vperm.xlu0 %318, %v257
        %v320 = vpop.permute.xlu0 %319
        %323 = vset.pattern.permute.xlu0 0
        %324 = vperm.xlu0 %323, %v258
        %v325 = vpop.permute.xlu0 %324
        %328 = vset.pattern.permute.xlu0 0
        %329 = vperm.xlu0 %328, %v259
        %v330 = vpop.permute.xlu0 %329
        %333 = vset.pattern.permute.xlu0 0
        %334 = vperm.xlu0 %333, %v260
        %v335 = vpop.permute.xlu0 %334
        %338 = vset.pattern.permute.xlu0 0
        %339 = vperm.xlu0 %338, %v261
        %v340 = vpop.permute.xlu0 %339
        %343 = vset.pattern.permute.xlu0 0
        %344 = vperm.xlu0 %343, %v262
        %v345 = vpop.permute.xlu0 %344
        %348 = vset.pattern.permute.xlu0 0
        %349 = vperm.xlu0 %348, %v263
        %v350 = vpop.permute.xlu0 %349
        %353 = vset.pattern.permute.xlu0 0
        %354 = vperm.xlu0 %353, %v264
        %v355 = vpop.permute.xlu0 %354
        %v357 = vadd.f32 %v320, %v309
        %v358 = vadd.f32 %v325, %v310
        %v359 = vadd.f32 %v330, %v311
        %v360 = vadd.f32 %v335, %v312
        %v361 = vadd.f32 %v340, %v313
        %v362 = vadd.f32 %v345, %v314
        %v363 = vadd.f32 %v350, %v315
        %v364 = vadd.f32 %v355, %v316
        %365 = vset.pattern.permute.xlu0 1
        %366 = vperm.xlu0 %365, %v249
        %v367 = vpop.permute.xlu0 %366
        %369 = vset.pattern.permute.xlu0 1
        %370 = vperm.xlu0 %369, %v250
        %v371 = vpop.permute.xlu0 %370
        %373 = vset.pattern.permute.xlu0 1
        %374 = vperm.xlu0 %373, %v251
        %v375 = vpop.permute.xlu0 %374
        %377 = vset.pattern.permute.xlu0 1
        %378 = vperm.xlu0 %377, %v252
        %v379 = vpop.permute.xlu0 %378
        %381 = vset.pattern.permute.xlu0 1
        %382 = vperm.xlu0 %381, %v253
        %v383 = vpop.permute.xlu0 %382
        %385 = vset.pattern.permute.xlu0 1
        %386 = vperm.xlu0 %385, %v254
        %v387 = vpop.permute.xlu0 %386
        %389 = vset.pattern.permute.xlu0 1
        %390 = vperm.xlu0 %389, %v255
        %v391 = vpop.permute.xlu0 %390
        %393 = vset.pattern.permute.xlu0 1
        %394 = vperm.xlu0 %393, %v256
        %v395 = vpop.permute.xlu0 %394
        %v397 = vlaneseq
        %v398 = vshrl.u32 %v397, 7
        %v399 = vsub.s32 1, %v398
        %v400 = vrot.slane %v248, %v399
        %v401 = vmul.f32 %v367, %v400
        %v402 = vmul.f32 %v371, %v400
        %v403 = vmul.f32 %v375, %v400
        %v404 = vmul.f32 %v379, %v400
        %v405 = vmul.f32 %v383, %v400
        %v406 = vmul.f32 %v387, %v400
        %v407 = vmul.f32 %v391, %v400
        %v408 = vmul.f32 %v395, %v400
        %v409 = vadd.f32 %v357, %v401
        %v410 = vadd.f32 %v358, %v402
        %v411 = vadd.f32 %v359, %v403
        %v412 = vadd.f32 %v360, %v404
        %v413 = vadd.f32 %v361, %v405
        %v414 = vadd.f32 %v362, %v406
        %v415 = vadd.f32 %v363, %v407
        %v416 = vadd.f32 %v364, %v408
        %417 = vset.pattern.permute.xlu0 2
        %418 = vperm.xlu0 %417, %v249
        %v419 = vpop.permute.xlu0 %418
        %421 = vset.pattern.permute.xlu0 2
        %422 = vperm.xlu0 %421, %v250
        %v423 = vpop.permute.xlu0 %422
        %425 = vset.pattern.permute.xlu0 2
        %426 = vperm.xlu0 %425, %v251
        %v427 = vpop.permute.xlu0 %426
        %429 = vset.pattern.permute.xlu0 2
        %430 = vperm.xlu0 %429, %v252
        %v431 = vpop.permute.xlu0 %430
        %433 = vset.pattern.permute.xlu0 2
        %434 = vperm.xlu0 %433, %v253
        %v435 = vpop.permute.xlu0 %434
        %437 = vset.pattern.permute.xlu0 2
        %438 = vperm.xlu0 %437, %v254
        %v439 = vpop.permute.xlu0 %438
        %441 = vset.pattern.permute.xlu0 2
        %442 = vperm.xlu0 %441, %v255
        %v443 = vpop.permute.xlu0 %442
        %445 = vset.pattern.permute.xlu0 2
        %446 = vperm.xlu0 %445, %v256
        %v447 = vpop.permute.xlu0 %446
        %v449 = vlaneseq
        %v450 = vshrl.u32 %v449, 7
        %v451 = vsub.s32 2, %v450
        %v452 = vrot.slane %v248, %v451
        %v453 = vmul.f32 %v419, %v452
        %v454 = vmul.f32 %v423, %v452
        %v455 = vmul.f32 %v427, %v452
        %v456 = vmul.f32 %v431, %v452
        %v457 = vmul.f32 %v435, %v452
        %v458 = vmul.f32 %v439, %v452
        %v459 = vmul.f32 %v443, %v452
        %v460 = vmul.f32 %v447, %v452
        %v461 = vadd.f32 %v409, %v453
        %v462 = vadd.f32 %v410, %v454
        %v463 = vadd.f32 %v411, %v455
        %v464 = vadd.f32 %v412, %v456
        %v465 = vadd.f32 %v413, %v457
        %v466 = vadd.f32 %v414, %v458
        %v467 = vadd.f32 %v415, %v459
        %v468 = vadd.f32 %v416, %v460
        %v469 = vmax.f32 %v461, 0.0
        %v470 = vmax.f32 %v462, 0.0
        %v471 = vmax.f32 %v463, 0.0
        %v472 = vmax.f32 %v464, 0.0
        %v473 = vmax.f32 %v465, 0.0
        %v474 = vmax.f32 %v466, 0.0
        %v475 = vmax.f32 %v467, 0.0
        %v476 = vmax.f32 %v468, 0.0
        %v477 = vld [vmem:[%s3] sm:$0xff]
        %v478 = vld [vmem:[%s3 + $0x8] sm:$0xff]
        %v479 = vld [vmem:[%s3 + $0x10] sm:$0xff]
        %v480 = vld [vmem:[%s3 + $0x18] sm:$0xff]
        %v481 = vld [vmem:[%s3 + $0x20] sm:$0xff]
        %v482 = vld [vmem:[%s3 + $0x28] sm:$0xff]
        %v483 = vld [vmem:[%s3 + $0x30] sm:$0xff]
        %v484 = vld [vmem:[%s3 + $0x38] sm:$0xff]
        %v485 = vld [vmem:[%s4] sm:$0xff]
        %v486 = vld [vmem:[%s4 + $0x8] sm:$0xff]
        %v487 = vld [vmem:[%s4 + $0x10] sm:$0xff]
        %v488 = vld [vmem:[%s4 + $0x18] sm:$0xff]
        %v489 = vld [vmem:[%s4 + $0x20] sm:$0xff]
        %v490 = vld [vmem:[%s4 + $0x28] sm:$0xff]
        %v491 = vld [vmem:[%s4 + $0x30] sm:$0xff]
        %v492 = vld [vmem:[%s4 + $0x38] sm:$0xff]
        %494 = vset.pattern.permute.xlu0 0
        %495 = vperm.xlu0 %494, %v485
        %v496 = vpop.permute.xlu0 %495
        %499 = vset.pattern.permute.xlu0 0
        %500 = vperm.xlu0 %499, %v486
        %v501 = vpop.permute.xlu0 %500
        %504 = vset.pattern.permute.xlu0 0
        %505 = vperm.xlu0 %504, %v487
        %v506 = vpop.permute.xlu0 %505
        %509 = vset.pattern.permute.xlu0 0
        %510 = vperm.xlu0 %509, %v488
        %v511 = vpop.permute.xlu0 %510
        %514 = vset.pattern.permute.xlu0 0
        %515 = vperm.xlu0 %514, %v489
        %v516 = vpop.permute.xlu0 %515
        %519 = vset.pattern.permute.xlu0 0
        %520 = vperm.xlu0 %519, %v490
        %v521 = vpop.permute.xlu0 %520
        %524 = vset.pattern.permute.xlu0 0
        %525 = vperm.xlu0 %524, %v491
        %v526 = vpop.permute.xlu0 %525
        %529 = vset.pattern.permute.xlu0 0
        %530 = vperm.xlu0 %529, %v492
        %v531 = vpop.permute.xlu0 %530
        %vm533 = vcmask 523264
        %v535 = vsel %vm533, %v477, 0
        %v538 = vsel %vm533, %v478, 0
        %v541 = vsel %vm533, %v479, 0
        %v544 = vsel %vm533, %v480, 0
        %v547 = vsel %vm533, %v481, 0
        %v550 = vsel %vm533, %v482, 0
        %v553 = vsel %vm533, %v483, 0
        %v556 = vsel %vm533, %v484, 0
        %558 = vmatprep.subr.mxu0 0.0
        %559 = vmatpush1.msra.mxu0 %v469
        %560 = vmatprep.subr.mxu0 0.0
        %561 = vmatpush1.msra.mxu0 %v470
        %562 = vmatprep.subr.mxu0 0.0
        %563 = vmatpush1.msra.mxu0 %v471
        %564 = vmatprep.subr.mxu0 0.0
        %565 = vmatpush1.msra.mxu0 %v472
        %566 = vmatprep.subr.mxu0 0.0
        %567 = vmatpush1.msra.mxu0 %v473
        %568 = vmatprep.subr.mxu0 0.0
        %569 = vmatpush1.msra.mxu0 %v474
        %570 = vmatprep.subr.mxu0 0.0
        %571 = vmatpush1.msra.mxu0 %v475
        %572 = vmatprep.subr.mxu0 0.0
        %573 = vmatpush1.msra.mxu0 %v476
        %574 = vmatprep.subr.mxu0 0.0
        %575 = vmatpush1.msra.mxu0 0.0
        %576 = vmatprep.subr.mxu0 0.0
        %577 = vmatpush1.msra.mxu0 0.0
        %578 = vmatprep.subr.mxu0 0.0
        %579 = vmatpush1.msra.mxu0 0.0
        %580 = vmatprep.subr.mxu0 0.0
        %581 = vmatpush1.msra.mxu0 0.0
        %582 = vmatprep.subr.mxu0 0.0
        %583 = vmatpush1.msra.mxu0 0.0
        %584 = vmatprep.subr.mxu0 0.0
        %585 = vmatpush1.msra.mxu0 0.0
        %586 = vmatprep.subr.mxu0 0.0
        %587 = vmatpush1.msra.mxu0 0.0
        %588 = vmatprep.subr.mxu0 0.0
        %589 = vmatpush1.msra.mxu0 0.0
        %590 = vmatprep.subr.mxu0 0.0
        %591 = vmatpush1.msra.mxu0 0.0
        %592 = vmatprep.subr.mxu0 0.0
        %593 = vmatpush1.msra.mxu0 0.0
        %594 = vmatprep.subr.mxu0 0.0
        %595 = vmatpush1.msra.mxu0 0.0
        %596 = vmatprep.subr.mxu0 0.0
        %597 = vmatpush1.msra.mxu0 0.0
        %598 = vmatprep.subr.mxu0 0.0
        %599 = vmatpush1.msra.mxu0 0.0
        %600 = vmatprep.subr.mxu0 0.0
        %601 = vmatpush1.msra.mxu0 0.0
        %602 = vmatprep.subr.mxu0 0.0
        %603 = vmatpush1.msra.mxu0 0.0
        %604 = vmatprep.subr.mxu0 0.0
        %605 = vmatpush1.msra.mxu0 0.0
        %606 = vmatprep.subr.mxu0 0.0
        %607 = vmatpush1.msra.mxu0 0.0
        %608 = vmatprep.subr.mxu0 0.0
        %609 = vmatpush1.msra.mxu0 0.0
        %610 = vmatprep.subr.mxu0 0.0
        %611 = vmatpush1.msra.mxu0 0.0
        %612 = vmatprep.subr.mxu0 0.0
        %613 = vmatpush1.msra.mxu0 0.0
        %614 = vmatprep.subr.mxu0 0.0
        %615 = vmatpush1.msra.mxu0 0.0
        %616 = vmatprep.subr.mxu0 0.0
        %617 = vmatpush1.msra.mxu0 0.0
        %618 = vmatprep.subr.mxu0 0.0
        %619 = vmatpush1.msra.mxu0 0.0
        %620 = vmatprep.subr.mxu0 0.0
        %621 = vmatpush1.msra.mxu0 0.0
        %622 = vmatprep.mubr.f32.mxu0 0.0
        %623 = vmatmul.mubr.f32.gmra.mrb[0].mxu0 %v535
        %v624 = vpop.f32.mrb[0].mxu0
        %v625 = vadd.f32 %v496, %v624
        %v626 = vpop.f32.mrb[0].mxu0
        %627 = vmatprep.mubr.f32.mxu0 0.0
        %628 = vmatmul.mubr.f32.gmra.mrb[0].mxu0 %v538
        %v629 = vpop.f32.mrb[0].mxu0
        %v630 = vadd.f32 %v501, %v629
        %v631 = vpop.f32.mrb[0].mxu0
        %632 = vmatprep.mubr.f32.mxu0 0.0
        %633 = vmatmul.mubr.f32.gmra.mrb[0].mxu0 %v541
        %v634 = vpop.f32.mrb[0].mxu0
        %v635 = vadd.f32 %v506, %v634
        %v636 = vpop.f32.mrb[0].mxu0
        %637 = vmatprep.mubr.f32.mxu0 0.0
        %638 = vmatmul.mubr.f32.gmra.mrb[0].mxu0 %v544
        %v639 = vpop.f32.mrb[0].mxu0
        %v640 = vadd.f32 %v511, %v639
        %v641 = vpop.f32.mrb[0].mxu0
        %642 = vmatprep.mubr.f32.mxu0 0.0
        %643 = vmatmul.mubr.f32.gmra.mrb[0].mxu0 %v547
        %v644 = vpop.f32.mrb[0].mxu0
        %v645 = vadd.f32 %v516, %v644
        %v646 = vpop.f32.mrb[0].mxu0
        %647 = vmatprep.mubr.f32.mxu0 0.0
        %648 = vmatmul.mubr.f32.gmra.mrb[0].mxu0 %v550
        %v649 = vpop.f32.mrb[0].mxu0
        %v650 = vadd.f32 %v521, %v649
        %v651 = vpop.f32.mrb[0].mxu0
        %652 = vmatprep.mubr.f32.mxu0 0.0
        %653 = vmatmul.mubr.f32.gmra.mrb[0].mxu0 %v553
        %v654 = vpop.f32.mrb[0].mxu0
        %v655 = vadd.f32 %v526, %v654
        %v656 = vpop.f32.mrb[0].mxu0
        %657 = vmatprep.mubr.f32.mxu0 0.0
        %658 = vmatmul.mubr.f32.gmra.mrb[0].mxu0 %v556
        %v659 = vpop.f32.mrb[0].mxu0
        %v660 = vadd.f32 %v531, %v659
        %v661 = vpop.f32.mrb[0].mxu0
        %662 = vdwg.mxu0
        %663 = vst [vmem:[%s239] sm:$0xff] %v625
        %664 = vst [vmem:[%s239 + $0x8] sm:$0xff] %v630
        %665 = vst [vmem:[%s239 + $0x10] sm:$0xff] %v635
        %666 = vst [vmem:[%s239 + $0x18] sm:$0xff] %v640
        %667 = vst [vmem:[%s239 + $0x20] sm:$0xff] %v645
        %668 = vst [vmem:[%s239 + $0x28] sm:$0xff] %v650
        %669 = vst [vmem:[%s239 + $0x30] sm:$0xff] %v655
        %670 = vst [vmem:[%s239 + $0x38] sm:$0xff] %v660
        %s671 = sand.u32 %s153, 1
        %s672 = scalar_lea.sflag [#allocation3], %s671
        %s673 = sand.u32 %s153, 1
        %s674 = smul.addr %s673, 64
        %s675 = scalar_lea.vmem [#allocation2], %s674
        // Predicated region
        $region41: #{tpu_custom_call.1} parent=39 // pred_check
          %p676 = pneg %p163
        $region42: #{tpu_custom_call.1} parent=39 // pred_check_branch
          %678 = sbr.rel (%p676) target = $region44
        $region43: #{tpu_custom_call.1} parent=39 // pred_region
          %s680 = ssub.s32 1024, 1024
          %681 = vsyncadd %s672, %s680
          %s682 = smul.addr %s23, 16
          %s683 = sadd.s32 %s24, %s682
          %s684 = smul.addr %s683, 128
          %s685 = scalar_lea.hbm %s5, %s684
          %s686 = sshll.u32 %s675, 4
          %s687 = int_to_ptr.vmem [resolvable:$true] %s686
          %692 = dma.vmem_to_hbm [thread:$0]  %s687, 1024, %s685, %s672, 128, 256, 8
        $region44: #{tpu_custom_call.1} parent=39 // pred_fallthru
          _
      $region40: #{tpu_custom_call.1} parent=5 // pred_fallthru
        _
      %p693 = scmp.le.s32.totalorder 2, %s14
      // Predicated region
      $region45: #{tpu_custom_call.1} parent=5 // pred_check
        %p694 = pneg %p693
      $region46: #{tpu_custom_call.1} parent=5 // pred_check_branch
        %696 = sbr.rel (%p694) target = $region48
      $region47: #{tpu_custom_call.1} parent=5 // pred_region
        %s697 = ssub.s32 %s14, 2
        // Predicated region
        $region49: #{tpu_custom_call.1} parent=47 // pred_check
          %p698 = pneg %p169
        $region50: #{tpu_custom_call.1} parent=47 // pred_check_branch
          %700 = sbr.rel (%p698) target = $region52
        $region51: #{tpu_custom_call.1} parent=47 // pred_region
          %s701 = sand.u32 %s154, 1
          %s702 = scalar_lea.sflag [#allocation3], %s701
          %s703 = sand.u32 %s154, 1
          %s704 = smul.addr %s703, 64
          %s705 = scalar_lea.vmem [#allocation2], %s704
          %706 = dma.done %s702, 1024
        $region52: #{tpu_custom_call.1} parent=47 // pred_fallthru
          _
      $region48: #{tpu_custom_call.1} parent=5 // pred_fallthru
        _
    $region6: #{tpu_custom_call.1} parent=1 // loop_footer
      %s18 = sadd.s32 1, %s14
    $region7: #{tpu_custom_call.1} parent=1 // loop_footer_branch
      %13 = sbr.rel target = $region3
    $region8: #{tpu_custom_call.1} parent=1 // loop_exit
      _
    %707 = vsyncpa [#allocation3], 1
    %s708 = scalar_lea.sflag [#allocation3], 1
    %709 = vsyncpa %s708, 1

</llo_original>
